<compile_context>
chip_gen: v7x
topology: tpu7x:2x2x1
jax: 0.10.0
libtpu: 0.0.40
codegen_flags: <defaults>
</compile_context>

<pallas_src>
import functools

import jax
import jax.numpy as jnp
from jax.experimental import pallas as pl
from jax.experimental.pallas import tpu as pltpu


def _round_up(x, m):
    return (x + m - 1) // m * m


def _store(loss, out_ref, *, reduction, batch):
    """loss: (TILE_B, 1) f32 per-row losses for this grid step."""
    tile_b = loss.shape[0]
    if reduction in ("mean", "sum"):
        i = pl.program_id(0)
        # Mask ragged (out-of-batch) rows of the last tile out of the sum.
        row_ids = i * tile_b + jax.lax.broadcasted_iota(jnp.int32, loss.shape, 0)
        loss = jnp.where(row_ids < batch, loss, 0.0)
        partial = jnp.sum(loss, axis=0, keepdims=True)          # (1, 1)
        out_ref[...] = partial.reshape(out_ref.shape).astype(out_ref.dtype)
    else:
        # Ragged rows of the last tile are clipped by Pallas on store.
        out_ref[...] = loss.astype(out_ref.dtype)


def _row_logsumexp(x):
    """Per-row max m and log-sum-exp(x - m); both (TILE_B, 1) f32."""
    m = jnp.max(x, axis=-1, keepdims=True)
    lse = jnp.log(jnp.sum(jnp.exp(x - m), axis=-1, keepdims=True))
    return m, lse


def _soft_ce_kernel_hard(logits_ref, tgt_ref, out_ref, *, num_classes,
                         label_smoothing, reduction, batch):
    x = logits_ref[...].astype(jnp.float32)                      # (TILE_B, C)
    tile_b, c = x.shape
    m, lse = _row_logsumexp(x)

    cls_iota = jax.lax.broadcasted_iota(jnp.int32, (tile_b, c), 1)
    onehot = cls_iota == tgt_ref[...]
    if label_smoothing > 0.0:
        w_hi = jnp.float32(1.0 - label_smoothing + label_smoothing / num_classes)
        w_lo = jnp.float32(label_smoothing / num_classes)
        wx = jnp.where(onehot, w_hi, w_lo) * x                   # fused weights
    else:
        wx = jnp.where(onehot, x, 0.0)
    dot_x = jnp.sum(wx, axis=-1, keepdims=True)
    # sum(w) == 1  =>  loss = (m + lse) - sum(w * x)
    loss = (m + lse) - dot_x
    _store(loss, out_ref, reduction=reduction, batch=batch)


def _soft_ce_kernel_soft(logits_ref, tgt_ref, out_ref, *, num_classes,
                         label_smoothing, reduction, batch):
    x = logits_ref[...].astype(jnp.float32)                      # (TILE_B, C)
    m, lse = _row_logsumexp(x)

    t = tgt_ref[...].astype(jnp.float32)
    if label_smoothing > 0.0:
        w = (1.0 - label_smoothing) * t + (label_smoothing / num_classes)
    else:
        w = t
    dot_x = jnp.sum(w * x, axis=-1, keepdims=True)
    wsum = jnp.sum(w, axis=-1, keepdims=True)
    # loss = -(w * (x - m - lse)).sum = (m + lse) * sum(w) - sum(w * x)
    loss = (m + lse) * wsum - dot_x
    _store(loss, out_ref, reduction=reduction, batch=batch)


def _sublane_multiple(dtype):
    size = jnp.dtype(dtype).itemsize
    return {4: 8, 2: 16, 1: 32}.get(size, 8)


def soft_cross_entropy_loss(outputs, targets, label_smoothing=0.0,
                            reduction="mean", block_rows=None):
    """Pallas implementation of SoftCrossEntropyLoss.forward."""
    outputs = jnp.asarray(outputs)
    targets = jnp.asarray(targets)
    assert outputs.ndim == 2
    B, C = outputs.shape
    hard = targets.ndim == 1

    # Sublane rounding from the input dtypes (8 is Mosaic's hard floor).
    sub = max(8, _sublane_multiple(outputs.dtype),
              8 if hard else _sublane_multiple(targets.dtype))

    # VMEM footprint accounting uses the lane-padded width of an f32 temp tile
    # (HBM traffic, however, only sees the true C since nothing is padded).
    c_lane = _round_up(max(C, 128), 128)

    # ---- generation-aware VMEM cap ------------------------------------------
    try:
        cap = int(getattr(pltpu.get_tpu_info(), "vmem_capacity_bytes",
                          128 * 2**20))
    except Exception:  # be conservative if the query is unavailable
        cap = 64 * 2**20
    cap_limit = max(16 * 2**20, min((3 * cap) // 4, 96 * 2**20))

    # ---- batch tiling --------------------------------------------------------
    if block_rows is None:
        # One f32 working tile of up to ~8 MiB (less on v7x), leaving room for
        # double-buffered inputs plus a handful of f32 temporaries (<~10 tiles).
        budget = min(8 * 2**20, cap_limit // 10)
        tile_b = max(sub, (budget // (c_lane * 4)) // sub * sub)
    else:
        tile_b = max(sub, _round_up(int(block_rows), sub))
    tile_b = min(tile_b, _round_up(B, sub))          # never exceed the batch
    nb = -(-B // tile_b)

    tile_bytes_f32 = tile_b * c_lane * 4
    vmem_limit = int(min(cap_limit, max(32 * 2**20, 10 * tile_bytes_f32)))

    # ---- targets (no padding; keep native dtype, upcast inside the kernel) ---
    if hard:
        tgt = targets.astype(jnp.int32).reshape(B, 1)
        tgt_spec = pl.BlockSpec((tile_b, 1), lambda i: (i, 0))
        kernel_fn = _soft_ce_kernel_hard
    else:
        tgt = targets
        tgt_spec = pl.BlockSpec((tile_b, C), lambda i: (i, 0))
        kernel_fn = _soft_ce_kernel_soft

    kernel = functools.partial(
        kernel_fn,
        num_classes=int(C),
        label_smoothing=float(label_smoothing),
        reduction=reduction,
        batch=int(B),
    )

    scalar_out = reduction in ("mean", "sum")
    if scalar_out:
        # Per-tile partial sums, one distinct block per grid step ("parallel"),
        # reduced in the wrapper.  (nb, 1, 1) so the last two block dims equal
        # the full array dims (tiling-rule compliant).
        out_shape = jax.ShapeDtypeStruct((nb, 1, 1), jnp.float32)
        out_spec = pl.BlockSpec((1, 1, 1), lambda i: (i, 0, 0))
    else:
        out_shape = jax.ShapeDtypeStruct((B, 1), jnp.float32)
        out_spec = pl.BlockSpec((tile_b, 1), lambda i: (i, 0))

    out = pl.pallas_call(
        kernel,
        out_shape=out_shape,
        grid=(nb,),
        in_specs=[
            pl.BlockSpec((tile_b, C), lambda i: (i, 0)),   # full-extent class dim
            tgt_spec,
        ],
        out_specs=out_spec,
        compiler_params=pltpu.CompilerParams(
            dimension_semantics=("parallel",),
            vmem_limit_bytes=vmem_limit,
        ),
    )(outputs, tgt)

    if scalar_out:
        total = jnp.sum(out[:, 0, 0])
        return total / B if reduction == "mean" else total
    return out[:, 0]


def _reference(outputs, targets, label_smoothing=0.0, reduction="mean"):
    # Pure-JAX reference mirroring the PyTorch forward.
    outputs = jnp.asarray(outputs, jnp.float32)
    C = outputs.shape[-1]
    log_probs = jax.nn.log_softmax(outputs, axis=-1)
    if targets.ndim == 1:
        one_hot = jax.nn.one_hot(targets, C, dtype=jnp.float32)
        smooth = (1 - label_smoothing) * one_hot + (
            label_smoothing / C if label_smoothing > 0 else 0.0)
    else:
        smooth = targets.astype(jnp.float32)
        if label_smoothing > 0:
            smooth = (1 - label_smoothing) * smooth + label_smoothing / C
    loss = -(smooth * log_probs).sum(axis=-1)
    if reduction == "mean":
        return loss.mean()
    if reduction == "sum":
        return loss.sum()
    return loss


if __name__ == "__main__":
    key = jax.random.PRNGKey(0)
    k1, k2, k3, k4, k5, k6 = jax.random.split(key, 6)

    ok = True

    # --- small CIFAR-10-like shapes (single-tile grid) -----------------------
    B, C = 8, 10
    logits = jax.random.normal(k1, (B, C), dtype=jnp.float32)
    hard_targets = jax.random.randint(k2, (B,), 0, C, dtype=jnp.int32)
    soft_targets = jax.nn.softmax(
        jax.random.normal(k3, (B, C), dtype=jnp.float32), axis=-1)

    got = jax.block_until_ready(
        soft_cross_entropy_loss(logits, hard_targets, 0.1, "mean"))
    want = _reference(logits, hard_targets, 0.1, "mean")
    ok &= bool(jnp.allclose(got, want, atol=1e-5, rtol=1e-5))

    got = jax.block_until_ready(
        soft_cross_entropy_loss(logits, soft_targets, 0.0, "sum"))
    want = _reference(logits, soft_targets, 0.0, "sum")
    ok &= bool(jnp.allclose(got, want, atol=1e-5, rtol=1e-5))

    got = jax.block_until_ready(
        soft_cross_entropy_loss(logits, hard_targets, 0.0, "none"))
    want = _reference(logits, hard_targets, 0.0, "none")
    ok &= bool(jnp.allclose(got, want, atol=1e-5, rtol=1e-5))

    got = jax.block_until_ready(
        soft_cross_entropy_loss(logits, soft_targets, 0.2, "mean"))
    want = _reference(logits, soft_targets, 0.2, "mean")
    ok &= bool(jnp.allclose(got, want, atol=1e-5, rtol=1e-5))

    # --- multi-tile grid + ragged last block (no HBM padding anywhere) -------
    B2 = 300
    logits2 = jax.random.normal(k4, (B2, C), dtype=jnp.float32)
    hard2 = jax.random.randint(k5, (B2,), 0, C, dtype=jnp.int32)
    soft2 = jax.nn.softmax(
        jax.random.normal(k6, (B2, C), dtype=jnp.float32), axis=-1)

    got = jax.block_until_ready(
        soft_cross_entropy_loss(logits2, hard2, 0.1, "mean", block_rows=128))
    want = _reference(logits2, hard2, 0.1, "mean")
    ok &= bool(jnp.allclose(got, want, atol=1e-5, rtol=1e-5))

    got = jax.block_until_ready(
        soft_cross_entropy_loss(logits2, soft2, 0.0, "none", block_rows=128))
    want = _reference(logits2, soft2, 0.0, "none")
    ok &= bool(jnp.allclose(got, want, atol=1e-5, rtol=1e-5))

    # Auto-sized single ragged block (exercises row masking with nb == 1).
    got = jax.block_until_ready(
        soft_cross_entropy_loss(logits2, hard2, 0.0, "sum"))
    want = _reference(logits2, hard2, 0.0, "sum")
    ok &= bool(jnp.allclose(got, want, atol=1e-5, rtol=1e-5))

    if ok:
        print("KERNEL_OK")
    else:
        raise SystemExit("mismatch vs reference")
</pallas_src>

<mosaic_0001>
module attributes {stable_mosaic.version = 11 : i64} {
  func.func @_soft_ce_kernel_hard(%arg0: i32, %arg1: memref<8x10xf32, #tpu.memory_space<vmem>>, %arg2: memref<8x1xi32, #tpu.memory_space<vmem>>, %arg3: memref<1x1x1xf32, #tpu.memory_space<vmem>>) attributes {dimension_semantics = [#tpu.dimension_semantics<parallel>], iteration_bounds = array<i64: 1>, scalar_prefetch = 0 : i64, scratch_operands = 0 : i64, tpu.core_type = #tpu.core_type<tc>, window_params = [{transform_indices = @transform_0, window_bounds = array<i64: 8, 10>}, {transform_indices = @transform_1, window_bounds = array<i64: 8, 1>}, {transform_indices = @transform_2, window_bounds = array<i64: 1, 1, 1>}]} {
    %c0 = arith.constant 0 : index
    %c0_0 = arith.constant 0 : index
    %0 = vector.load %arg1[%c0, %c0_0] : memref<8x10xf32, #tpu.memory_space<vmem>>, vector<8x10xf32>
    %cst = arith.constant dense<0xFF800000> : vector<8xf32>
    %1 = vector.multi_reduction <maximumf>, %0, %cst [1] : vector<8x10xf32> to vector<8xf32>
    %2 = vector.shape_cast %1 : vector<8xf32> to vector<8x1xf32>
    %3 = vector.broadcast %2 : vector<8x1xf32> to vector<8x10xf32>
    %4 = arith.subf %0, %3 : vector<8x10xf32>
    %5 = math.exp %4 : vector<8x10xf32>
    %cst_1 = arith.constant dense<0.000000e+00> : vector<8xf32>
    %6 = vector.multi_reduction <add>, %5, %cst_1 [1] : vector<8x10xf32> to vector<8xf32>
    %7 = vector.shape_cast %6 : vector<8xf32> to vector<8x1xf32>
    %8 = math.log %7 : vector<8x1xf32>
    %9 = tpu.iota {dimensions = array<i32: 1>} : vector<8x10xi32>
    %c0_2 = arith.constant 0 : index
    %c0_3 = arith.constant 0 : index
    %10 = vector.load %arg2[%c0_2, %c0_3] : memref<8x1xi32, #tpu.memory_space<vmem>>, vector<8x1xi32>
    %11 = vector.broadcast %10 : vector<8x1xi32> to vector<8x10xi32>
    %12 = arith.cmpi eq, %9, %11 : vector<8x10xi32>
    %cst_4 = arith.constant 9.100000e-01 : f32
    %cst_5 = arith.constant 0.00999999977 : f32
    %13 = vector.broadcast %cst_4 : f32 to vector<8x10xf32>
    %14 = vector.broadcast %cst_5 : f32 to vector<8x10xf32>
    %15 = arith.select %12, %13, %14 : vector<8x10xi1>, vector<8x10xf32>
    %16 = arith.mulf %15, %0 : vector<8x10xf32>
    %cst_6 = arith.constant dense<0.000000e+00> : vector<8xf32>
    %17 = vector.multi_reduction <add>, %16, %cst_6 [1] : vector<8x10xf32> to vector<8xf32>
    %18 = vector.shape_cast %17 : vector<8xf32> to vector<8x1xf32>
    %19 = arith.addf %2, %8 : vector<8x1xf32>
    %20 = arith.subf %19, %18 : vector<8x1xf32>
    %c8_i32 = arith.constant 8 : i32
    %21 = arith.muli %arg0, %c8_i32 : i32
    %22 = tpu.iota {dimensions = array<i32: 0>} : vector<8x1xi32>
    %23 = vector.broadcast %21 : i32 to vector<8x1xi32>
    %24 = arith.addi %23, %22 : vector<8x1xi32>
    %c8_i32_7 = arith.constant 8 : i32
    %25 = vector.broadcast %c8_i32_7 : i32 to vector<8x1xi32>
    %26 = arith.cmpi slt, %24, %25 : vector<8x1xi32>
    %cst_8 = arith.constant 0.000000e+00 : f32
    %27 = vector.broadcast %cst_8 : f32 to vector<8x1xf32>
    %28 = arith.select %26, %20, %27 : vector<8x1xi1>, vector<8x1xf32>
    %cst_9 = arith.constant dense<0.000000e+00> : vector<1xf32>
    %29 = vector.multi_reduction <add>, %28, %cst_9 [0] : vector<8x1xf32> to vector<1xf32>
    %30 = vector.shape_cast %29 : vector<1xf32> to vector<1x1xf32>
    %31 = vector.shape_cast %30 : vector<1x1xf32> to vector<1x1x1xf32>
    %c0_10 = arith.constant 0 : index
    %c0_11 = arith.constant 0 : index
    %c0_12 = arith.constant 0 : index
    %32 = vector.load %arg3[%c0_10, %c0_11, %c0_12] : memref<1x1x1xf32, #tpu.memory_space<vmem>>, vector<1x1x1xf32>
    tpu.vector_store %arg3[%c0_10, %c0_11, %c0_12], %31 {strides = array<i32>} : memref<1x1x1xf32, #tpu.memory_space<vmem>>, vector<1x1x1xf32>,
    return
  }
  func.func @transform_0(%arg0: i32) -> (i32, i32) {
    %c0_i32 = arith.constant 0 : i32
    %c0_i32_0 = arith.constant 0 : i32
    return %arg0, %c0_i32 : i32, i32
  }
  func.func @transform_1(%arg0: i32) -> (i32, i32) {
    %c0_i32 = arith.constant 0 : i32
    %c0_i32_0 = arith.constant 0 : i32
    return %arg0, %c0_i32 : i32, i32
  }
  func.func @transform_2(%arg0: i32) -> (i32, i32, i32) {
    %c0_i32 = arith.constant 0 : i32
    %c0_i32_0 = arith.constant 0 : i32
    %c0_i32_1 = arith.constant 0 : i32
    return %arg0, %c0_i32, %c0_i32_0 : i32, i32, i32
  }
}

</mosaic_0001>

<llo_original>
// kernel: tpu_custom_call.1
$region0: #{tpu_custom_call.1}
  #allocation0 [shape = 'u32[]', space=smem, size = 0x4, offset = 0x4, fixed_abs, tag = 'smem constant byte address 0x4 - core index']
  #allocation1 [shape = 'u32[144,128]{1,0:T(1,128)}', space=vmem, size = 0x12000, scoped, tag = 'internal scratch']
  %s0 = inlined_call_operand.vmem [shape: f32[8,10], index: 0, kind: input, shape index: {}]
  %s1 = inlined_call_operand.vmem [shape: s32[8,1], index: 1, kind: input, shape index: {}]
  %s2 = inlined_call_operand.hbm [shape: f32[1,1,1], index: 2, kind: output, shape index: {}]
  %s3 = sld [smem:[#allocation0]]
  $region18: #{tpu_custom_call.1} parent=0
    _
  %s5 = ssub.s32 1, %s3
  %s6 = scalar_select 0, %s5, %s3
  $region1: #{tpu_custom_call.1} parent=0
    #allocation2 [shape = 'u8[512]{0}', space=vmem, size = 0x400, scoped, tag = 'output window, operand 0, single buffered']
    #allocation3 [shape = 's32[1]{0}', space=sflag, size = 0x4, scoped, tag = 'scoped memory for tpu_custom_call.1']
    %7 = vsyncpa [#allocation3], 0
    // Predicated region
    $region2: #{tpu_custom_call.1} parent=1 // pred_check
      _
    $region3: #{tpu_custom_call.1} parent=1 // pred_check_branch
      %9 = sbr.rel (0) target = $region5
    $region4: #{tpu_custom_call.1} parent=1 // pred_region
      _
    $region5: #{tpu_custom_call.1} parent=1 // pred_fallthru
      _
    // Predicated region
    $region6: #{tpu_custom_call.1} parent=1 // pred_check
      _
    $region7: #{tpu_custom_call.1} parent=1 // pred_check_branch
      %11 = sbr.rel (0) target = $region9
    $region8: #{tpu_custom_call.1} parent=1 // pred_region
      _
    $region9: #{tpu_custom_call.1} parent=1 // pred_fallthru
      _
    %v12 = vld [vmem:[%s0] sm:$0xff]
    %vm13 = vcmask 80896
    %v14 = vsel %vm13, %v12, -inf
    %15 = vmax.xlane.f32.xlu0 %v14
    %v16 = vpop.xlane.xlu0 %15
    %v17 = vsub.f32 %v12, %v16
    %v18 = vmul.f32 %v17, 1.442695
    %v19 = vpow.pop %v18
    %v20 = vsel %vm13, %v19, 0.0
    %21 = vadd.xlane.f32.xlu0 %v20
    %v22 = vpop.xlane.xlu0 %21
    %v23 = vlog2.pop %v22
    %v24 = vmul.f32 %v23, 0.6931472
    %v25 = vlaneseq
    %v26 = vand.u32 %v25, 127
    %v27 = vld [vmem:[%s1] sm:$0xff]
    %28 = vset.pattern.permute.xlu0 0
    %29 = vperm.xlu0 %28, %v27
    %v30 = vpop.permute.xlu0 %29
    %vm31 = vcmp.eq.s32.totalorder %v26, %v30
    %v32 = vsel %vm31, 0.91, 0.01
    %v33 = vmul.f32 %v32, %v12
    %v34 = vsel %vm13, %v33, 0.0
    %35 = vadd.xlane.f32.xlu0 %v34
    %v36 = vpop.xlane.xlu0 %35
    %v37 = vadd.f32 %v16, %v24
    %v38 = vsub.f32 %v37, %v36
    %s39 = smul.u32 0, 8
    %v40 = vlaneseq
    %v41 = vshrl.u32 %v40, 7
    %v42 = vstv %s39
    %v43 = vadd.s32 %v42, %v41
    %vm44 = vcmp.lt.s32.totalorder %v43, 8
    %v45 = vsel %vm44, %v38, 0.0
    %v46 = vrot.slane %v45, 4
    %v47 = vadd.f32 %v45, %v46
    %v48 = vrot.slane %v47, 2
    %v49 = vadd.f32 %v47, %v48
    %v50 = vrot.slane %v49, 1
    %v51 = vadd.f32 %v49, %v50
    %vm52 = vcmask 0
    %53 = vst.msk [vmem:[#allocation2] sm:$0x1] %vm52, %v51
    // Predicated region
    $region10: #{tpu_custom_call.1} parent=1 // pred_check
      _
    $region11: #{tpu_custom_call.1} parent=1 // pred_check_branch
      %55 = sbr.rel (0) target = $region13
    $region12: #{tpu_custom_call.1} parent=1 // pred_region
      %s57 = ssub.s32 16, 16
      %58 = vsyncadd [#allocation3], %s57
      %s60 = sshll.u32 [#allocation2], 4
      %s61 = int_to_ptr.vmem [resolvable:$true] %s60
      %63 = dma.vmem_to_hbm [thread:$0]  %s61, 16, %s2, [#allocation3]
    $region13: #{tpu_custom_call.1} parent=1 // pred_fallthru
      _
    // Predicated region
    $region14: #{tpu_custom_call.1} parent=1 // pred_check
      _
    $region15: #{tpu_custom_call.1} parent=1 // pred_check_branch
      %65 = sbr.rel (0) target = $region17
    $region16: #{tpu_custom_call.1} parent=1 // pred_region
      %66 = dma.done [#allocation3], 16
    $region17: #{tpu_custom_call.1} parent=1 // pred_fallthru
      _
    %67 = vsyncpa [#allocation3], 1

</llo_original>
